<compile_context>
chip_gen: v7x
topology: tpu7x:2x2x1
jax: 0.10.0
libtpu: 0.0.40
codegen_flags: <defaults>
</compile_context>

<pallas_src>
from collections import OrderedDict
from functools import lru_cache

import jax
import jax.numpy as jnp
from jax.experimental import pallas as pl
from jax.experimental.pallas import tpu as pltpu


# ----------------------------- Pallas kernel ------------------------------ #

def _copy_kernel(x_ref, o_ref):
    # Identity pass-through: the only tensor semantics of the base Module.
    o_ref[...] = x_ref[...]


# sublane multiple by element size (f32->8, bf16/f16->16, int8/fp8->32)
_SUBLANE_BY_ITEMSIZE = {1: 32, 2: 16, 4: 8, 8: 8}
# TODO(synk): 64-bit dtypes are not native on the TPU vector path; with x64
# enabled this copy may fail to lower / be slow.  Not handled specially.

# ~4 MiB blocks -> 16 MiB total with double-buffered in+out blocks.  Safe on
# all generations once the scoped VMEM limit is raised to 32 MiB (v5e default
# is 16 MiB; v7x default 32 MiB / 64 MiB physical; v6e has 128 MiB).
_TARGET_BLOCK_BYTES = 4 * 1024 * 1024
_VMEM_LIMIT_BYTES = 32 * 1024 * 1024


@lru_cache(maxsize=None)
def _get_tiled_copy(R, C, dtype_name):
    """Build (once per (R, C, dtype)) a jitted, aliased, tiled identity copy."""
    dtype = jnp.dtype(dtype_name)
    itemsize = dtype.itemsize
    sub = _SUBLANE_BY_ITEMSIZE.get(itemsize, 8)

    # Rows per block: aim at ~_TARGET_BLOCK_BYTES, multiple of the sublane
    # count, capped so the grid has >=2 steps when R allows it (megacore) and
    # never exceeds the sublane-rounded row count.
    rows = max(sub, (_TARGET_BLOCK_BYTES // max(1, C * itemsize)) // sub * sub)
    if R > sub:
        half = -(-((R + 1) // 2) // sub) * sub      # ceil(R/2) rounded to sub
        rows = min(rows, max(sub, half))
    rows = min(rows, -(-R // sub) * sub)

    grid = (pl.cdiv(R, rows),)   # ragged tail block handled by Pallas masking
    copy = pl.pallas_call(
        _copy_kernel,
        out_shape=jax.ShapeDtypeStruct((R, C), dtype),
        grid_spec=pltpu.PrefetchScalarGridSpec(
            num_scalar_prefetch=0,
            grid=grid,
            in_specs=[pl.BlockSpec((rows, C), lambda i: (i, 0))],
            out_specs=pl.BlockSpec((rows, C), lambda i: (i, 0)),
        ),
        # Output aliases the (donated) input: no second HBM allocation.
        input_output_aliases={0: 0},
        compiler_params=pltpu.CompilerParams(
            dimension_semantics=("parallel",),        # shard grid across TCs on v7x
            vmem_limit_bytes=_VMEM_LIMIT_BYTES,
        ),
        cost_estimate=pl.CostEstimate(
            flops=0, transcendentals=0, bytes_accessed=2 * R * C * itemsize),
    )
    # Donate so the in-place alias is honored without a defensive copy; the
    # argument is always a freshly-dispatched 2-D view, never the caller's
    # original array, so donation is safe.
    return jax.jit(copy, donate_argnums=(0,))


def pallas_passthrough(x):
    """Identity pass-through of an arbitrary-shaped array via a Pallas kernel.

    Native dtype, lane-dense 2-D view (last dim 128..1024), in-place aliased
    output.  The 128-aligned bulk goes through the kernel; a <128-element
    ragged tail (and arrays smaller than 128 elements) are passed through
    unchanged — they are an identity, so no narrow masked-lane kernel is ever
    emitted.
    """
    x = jnp.asarray(x)
    n = x.size
    if n < 128:
        # Tiny (< one lane row): a Pallas copy would be pure overhead.
        return x

    main = (n // 128) * 128
    flat = x.reshape(-1)                      # free row-major reshape

    width = 128
    for w in (1024, 512, 256):
        if main % w == 0:
            width = w
            break

    bulk2d = (flat if main == n else flat[:main]).reshape(-1, width)
    copy = _get_tiled_copy(bulk2d.shape[0], width, jnp.dtype(x.dtype).name)
    out_bulk = copy(bulk2d)

    if main == n:
        return out_bulk.reshape(x.shape)
    # <128-element ragged tail: identity, stitched back unchanged.
    return jnp.concatenate([out_bulk.reshape(-1), flat[main:]]).reshape(x.shape)


# --------------------------- Module (JAX port) ----------------------------- #

class Module:
    """JAX/Pallas port of gpytorch's base Module.

    Registry bookkeeping (_priors, _derived_priors, _variational_strategies,
    _parameters, _modules) is plain Python; the tensor pass-through in
    __call__ goes through the Pallas identity kernel when
    materialize_outputs=True (default), or is returned directly otherwise
    (the torch-equivalent, zero-cost behavior).
    """

    def __init__(self, materialize_outputs=True):
        self._parameters = OrderedDict()
        self._modules = OrderedDict()
        self._priors = OrderedDict()
        self._derived_priors = OrderedDict()
        self._variational_strategies = OrderedDict()
        self._materialize_outputs = materialize_outputs

    # ---- parameter / prior bookkeeping (no tensor compute) ----
    def register_parameter(self, name, parameter, prior=None):
        if "_parameters" not in self.__dict__:
            raise AttributeError(
                "Cannot assign parameter before Module.__init__() call")
        self._parameters[name] = jnp.asarray(parameter)
        if prior is not None:
            self.set_parameter_priors(**{name: prior})

    def set_parameter_priors(self, **kwargs):
        for name, prior in kwargs.items():
            if name not in self._parameters:
                raise AttributeError(
                    "Unknown parameter {name} for {module}".format(
                        name=name, module=self.__class__.__name__))
            self._priors[name] = prior
        return self

    def register_derived_prior(self, name, prior, parameter_names, transform):
        self._modules[name] = prior
        self._derived_priors[name] = (prior, tuple(parameter_names), transform)

    def register_variational_strategy(self, name):
        self._variational_strategies[name] = None

    def update_variational_strategy(self, name, variational_strategy):
        if name not in self._variational_strategies:
            raise RuntimeError(
                "variational strategy {} not registered".format(name))
        self._variational_strategies[name] = variational_strategy

    def initialize(self, **kwargs):
        # TODO(synk): prior.is_in_support() validation is skipped (no Prior
        # objects in this port).
        for name, val in kwargs.items():
            if name not in self._parameters:
                raise AttributeError(
                    "Unknown parameter {p} for {c}".format(
                        p=name, c=self.__class__.__name__))
            param = self._parameters[name]
            if isinstance(val, (float, int)):
                self._parameters[name] = jnp.full_like(param, val)
            else:
                self._parameters[name] = jnp.asarray(
                    val, dtype=param.dtype).reshape(param.shape)
        return self

    def named_parameters(self):
        for name, p in self._parameters.items():
            yield name, p

    def named_parameter_priors(self):
        for name, p in self._parameters.items():
            prior = self._priors.get(name)
            if prior is not None:
                yield name, p, prior

    def named_variational_strategies(self):
        for name, strategy in self._variational_strategies.items():
            if strategy is not None:
                yield name, strategy

    def variational_strategies(self):
        for _, strategy in self.named_variational_strategies():
            yield strategy

    # ---- forward / call ----
    def forward(self, *inputs, **kwargs):
        raise NotImplementedError

    def _pass_through(self, out):
        return pallas_passthrough(out) if self._materialize_outputs else out

    def __call__(self, *inputs, **kwargs):
        outputs = self.forward(*inputs, **kwargs)
        if isinstance(outputs, jax.Array):
            return self._pass_through(outputs)
        if not isinstance(outputs, (tuple, list)):
            raise RuntimeError(
                "Output must be an array or a tuple/list of arrays. Was a "
                "{}".format(outputs.__class__.__name__))
        for output in outputs:
            if not isinstance(output, jax.Array):
                raise RuntimeError(
                    "Output must be an array. Was a {}".format(
                        output.__class__.__name__))
        outputs = tuple(self._pass_through(o) for o in outputs)
        if len(outputs) == 1:
            outputs = outputs[0]
        return outputs


class _IdentityModule(Module):
    """Minimal concrete subclass so the base-class __call__ path is exercised."""

    def __init__(self, param_shape=(4,)):
        super().__init__()
        self.register_parameter(
            "log_lengthscale", jnp.zeros(param_shape, jnp.float32))

    def forward(self, x):
        return x


# --------------------------------- main ------------------------------------ #

if __name__ == "__main__":
    key = jax.random.PRNGKey(0)

    mod = _IdentityModule()
    mod.initialize(log_lengthscale=0.5)

    # NCHW float32 input: 2048 elems -> lane-dense (2, 1024) view, in-place copy
    x = jax.random.normal(key, (2, 4, 16, 16), dtype=jnp.float32)
    y = jax.block_until_ready(mod(x))
    assert y.shape == x.shape and y.dtype == x.dtype
    assert bool(jnp.array_equal(y, x)), "f32 pass-through mismatch"

    # int32 with a non-128-divisible element count (1155 = 9*128 + 3):
    # lane-dense (9, 128) bulk through the kernel + 3-element identity tail.
    xi = jax.random.randint(key, (7, 33, 5), minval=0, maxval=1 << 30,
                            dtype=jnp.int32)
    yi = jax.block_until_ready(mod(xi))
    assert yi.shape == xi.shape and yi.dtype == xi.dtype
    assert bool(jnp.array_equal(yi, xi)), "int32 ragged pass-through mismatch"

    # bf16 input: 512 elems -> lane-dense (1, 512) view, native-dtype copy
    xb = jax.random.normal(key, (2, 8, 32), dtype=jnp.bfloat16)
    yb = jax.block_until_ready(mod(xb))
    assert yb.shape == xb.shape and yb.dtype == xb.dtype
    assert bool(jnp.array_equal(yb, xb)), "bf16 pass-through mismatch"

    # tiny array (< 128 elems): identity is elided (no kernel, no HBM traffic)
    xt = jax.random.normal(key, (3, 5, 7), dtype=jnp.float32)
    yt = jax.block_until_ready(mod(xt))
    assert yt.shape == xt.shape and yt.dtype == xt.dtype
    assert bool(jnp.array_equal(yt, xt)), "tiny pass-through mismatch"

    print("KERNEL_OK")
</pallas_src>

<mosaic_0001>
module attributes {stable_mosaic.version = 11 : i64} {
  func.func @_copy_kernel(%arg0: i32, %arg1: memref<8x1024xf32, #tpu.memory_space<vmem>>, %arg2: memref<8x1024xf32, #tpu.memory_space<vmem>>) attributes {dimension_semantics = [#tpu.dimension_semantics<parallel>], iteration_bounds = array<i64: 1>, scalar_prefetch = 0 : i64, scratch_operands = 0 : i64, tpu.core_type = #tpu.core_type<tc>, window_params = [{transform_indices = @transform_0, window_bounds = array<i64: 8, 1024>}, {transform_indices = @transform_1, window_bounds = array<i64: 8, 1024>}]} {
    %c0 = arith.constant 0 : index
    %c0_0 = arith.constant 0 : index
    %0 = vector.load %arg1[%c0, %c0_0] : memref<8x1024xf32, #tpu.memory_space<vmem>>, vector<8x1024xf32>
    %c0_1 = arith.constant 0 : index
    %c0_2 = arith.constant 0 : index
    %1 = vector.load %arg2[%c0_1, %c0_2] : memref<8x1024xf32, #tpu.memory_space<vmem>>, vector<8x1024xf32>
    tpu.vector_store %arg2[%c0_1, %c0_2], %0 {strides = array<i32>} : memref<8x1024xf32, #tpu.memory_space<vmem>>, vector<8x1024xf32>,
    return
  }
  func.func @transform_0(%arg0: i32) -> (i32, i32) {
    %c0_i32 = arith.constant 0 : i32
    %c0_i32_0 = arith.constant 0 : i32
    return %arg0, %c0_i32 : i32, i32
  }
  func.func @transform_1(%arg0: i32) -> (i32, i32) {
    %c0_i32 = arith.constant 0 : i32
    %c0_i32_0 = arith.constant 0 : i32
    return %arg0, %c0_i32 : i32, i32
  }
}

</mosaic_0001>

<llo_original>
// kernel: tpu_custom_call.1
$region0: #{tpu_custom_call.1}
  #allocation0 [shape = 'u32[]', space=smem, size = 0x4, offset = 0x4, fixed_abs, tag = 'smem constant byte address 0x4 - core index']
  #allocation1 [shape = 'u32[144,128]{1,0:T(1,128)}', space=vmem, size = 0x12000, scoped, tag = 'internal scratch']
  %s0 = inlined_call_operand.hbm [shape: f32[2,1024], index: 0, kind: input, shape index: {}, may-alias: {0,1}]
  %s1 = inlined_call_operand.hbm [shape: f32[2,1024], index: 1, kind: output, shape index: {}, may-alias: {0,1}]
  %s2 = sld [smem:[#allocation0]]
  $region18: #{tpu_custom_call.1} parent=0
    _
  %s4 = ssub.s32 1, %s2
  %s5 = scalar_select 0, %s4, %s2
  $region1: #{tpu_custom_call.1} parent=0
    #allocation2 [shape = 'u8[32768]{0}', space=vmem, size = 0x8000, scoped, tag = 'input window, operand 0, single buffered']
    #allocation3 [shape = 's32[1]{0}', space=sflag, size = 0x4, scoped, tag = 'scoped memory for tpu_custom_call.1']
    #allocation4 [shape = 's32[1]{0}', space=sflag, size = 0x4, scoped, tag = 'scoped memory for tpu_custom_call.1']
    #allocation5 [shape = 'u8[32768]{0}', space=vmem, size = 0x8000, scoped, tag = 'output window, operand 0, single buffered']
    %6 = vsyncpa [#allocation3], 0
    %7 = vsyncpa [#allocation4], 0
    // Predicated region
    $region2: #{tpu_custom_call.1} parent=1 // pred_check
      _
    $region3: #{tpu_custom_call.1} parent=1 // pred_check_branch
      %9 = sbr.rel (0) target = $region5
    $region4: #{tpu_custom_call.1} parent=1 // pred_region
      %s11 = ssub.s32 1024, 256
      %12 = vsyncadd [#allocation3], %s11
      %s13 = sshll.u32 [#allocation2], 4
      %s14 = int_to_ptr.vmem [resolvable:$true] %s13
      %19 = dma.hbm_to_vmem [thread:$0]  %s0, 256, %s14, [#allocation3], 256, 256, 16
    $region5: #{tpu_custom_call.1} parent=1 // pred_fallthru
      _
    // Predicated region
    $region6: #{tpu_custom_call.1} parent=1 // pred_check
      _
    $region7: #{tpu_custom_call.1} parent=1 // pred_check_branch
      %21 = sbr.rel (0) target = $region9
    $region8: #{tpu_custom_call.1} parent=1 // pred_region
      %22 = dma.done [#allocation3], 1024
    $region9: #{tpu_custom_call.1} parent=1 // pred_fallthru
      _
    %v23 = vld [vmem:[#allocation2] sm:$0xff]
    %v24 = vld [vmem:[#allocation2 + $0x8] sm:$0xff]
    %v25 = vld [vmem:[#allocation2 + $0x10] sm:$0xff]
    %v26 = vld [vmem:[#allocation2 + $0x18] sm:$0xff]
    %v27 = vld [vmem:[#allocation2 + $0x20] sm:$0xff]
    %v28 = vld [vmem:[#allocation2 + $0x28] sm:$0xff]
    %v29 = vld [vmem:[#allocation2 + $0x30] sm:$0xff]
    %v30 = vld [vmem:[#allocation2 + $0x38] sm:$0xff]
    %31 = vst [vmem:[#allocation5] sm:$0xff] %v23
    %32 = vst [vmem:[#allocation5 + $0x8] sm:$0xff] %v24
    %33 = vst [vmem:[#allocation5 + $0x10] sm:$0xff] %v25
    %34 = vst [vmem:[#allocation5 + $0x18] sm:$0xff] %v26
    %35 = vst [vmem:[#allocation5 + $0x20] sm:$0xff] %v27
    %36 = vst [vmem:[#allocation5 + $0x28] sm:$0xff] %v28
    %37 = vst [vmem:[#allocation5 + $0x30] sm:$0xff] %v29
    %38 = vst [vmem:[#allocation5 + $0x38] sm:$0xff] %v30
    // Predicated region
    $region10: #{tpu_custom_call.1} parent=1 // pred_check
      _
    $region11: #{tpu_custom_call.1} parent=1 // pred_check_branch
      %40 = sbr.rel (0) target = $region13
    $region12: #{tpu_custom_call.1} parent=1 // pred_region
      %s42 = ssub.s32 1024, 256
      %43 = vsyncadd [#allocation4], %s42
      %s44 = sshll.u32 [#allocation5], 4
      %s45 = int_to_ptr.vmem [resolvable:$true] %s44
      %50 = dma.vmem_to_hbm [thread:$0]  %s45, 256, %s1, [#allocation4], 256, 256, 16
    $region13: #{tpu_custom_call.1} parent=1 // pred_fallthru
      _
    // Predicated region
    $region14: #{tpu_custom_call.1} parent=1 // pred_check
      _
    $region15: #{tpu_custom_call.1} parent=1 // pred_check_branch
      %52 = sbr.rel (0) target = $region17
    $region16: #{tpu_custom_call.1} parent=1 // pred_region
      %53 = dma.done [#allocation4], 1024
    $region17: #{tpu_custom_call.1} parent=1 // pred_fallthru
      _
    %54 = vsyncpa [#allocation3], 1
    %55 = vsyncpa [#allocation4], 1

</llo_original>
